<compile_context>
chip_gen: v5e
topology: v5e:2x2
jax: 0.10.0
libtpu: 0.0.40
codegen_flags: <defaults>
</compile_context>

<pallas_src>
import functools

import jax
import jax.numpy as jnp
from jax.experimental import pallas as pl
from jax.experimental.pallas import tpu as pltpu


def _round_up(x, m):
    return ((x + m - 1) // m) * m


def _point_one_channel_kernel(x_ref, w1_ref, b1_ref, w2_ref, b2_ref,
                              w3_ref, b3_ref, o_ref, *, compute_dtype):
    x = x_ref[0]                                     # (1, TM) f32 pixels

    # conv1 (1 -> 64): with a single input channel a 1x1 conv is a broadcast
    # multiply; keep it (and bias + relu) in f32 on the VPU.
    h1 = jnp.maximum(w1_ref[...] * x + b1_ref[...], 0.0)            # (64, TM)

    # conv2 (64 -> 64) on the MXU; operands in compute_dtype, f32 accumulate.
    h2 = jnp.dot(w2_ref[...], h1.astype(compute_dtype),
                 preferred_element_type=jnp.float32)
    h2 = jnp.maximum(h2 + b2_ref[...], 0.0)                         # (64, TM)

    # conv3 (64 -> 16) on the MXU.
    y = jnp.dot(w3_ref[...], h2.astype(compute_dtype),
                preferred_element_type=jnp.float32) + b3_ref[...]   # (16, TM)

    # XQuantize: round (jnp.round is half-to-even, same as torch.round).
    o_ref[0] = jnp.round(y)


def point_one_channel_forward(params, x, *, tm_max=8192,
                              compute_dtype=jnp.bfloat16):
    """Forward pass of PointOneChannel.  x: (B, 1, H, W) -> (B, 16, H, W)."""
    w1, b1, w2, b2, w3, b3 = params
    B, C, H, W = x.shape
    assert C == 1, "PointOneChannel takes a single input channel"
    HW = H * W

    # Pick the pixel tile: as large as possible (<= tm_max), multiple of 128.
    tm_max = max(128, (tm_max // 128) * 128)
    n_lane = _round_up(HW, 128)
    tm = min(tm_max, n_lane)
    if B == 1 and n_lane > 128:
        # Split the pixel axis so both v7x TensorCores get work.
        tm = min(tm, _round_up((n_lane + 1) // 2, 128))
    hw_pad = _round_up(HW, tm)

    # (B, 1, HW): a pure reshape (no transpose); lane-pad the pixel axis.
    x2 = x.reshape(B, 1, HW).astype(jnp.float32)
    if hw_pad != HW:
        x2 = jnp.pad(x2, ((0, 0), (0, 0), (0, hw_pad - HW)))

    def const_spec(shape):
        # Full-array weight block, constant index -> fetched once, stays resident.
        return pl.BlockSpec(shape, lambda b, t: (0,) * len(shape))

    kernel = functools.partial(_point_one_channel_kernel,
                               compute_dtype=compute_dtype)

    out = pl.pallas_call(
        kernel,
        out_shape=jax.ShapeDtypeStruct((B, 16, hw_pad), jnp.float32),
        grid_spec=pltpu.PrefetchScalarGridSpec(
            num_scalar_prefetch=0,
            grid=(B, hw_pad // tm),
            in_specs=[
                pl.BlockSpec((1, 1, tm), lambda b, t: (b, 0, t)),  # x
                const_spec((64, 1)),    # w1
                const_spec((64, 1)),    # b1
                const_spec((64, 64)),   # w2
                const_spec((64, 1)),    # b2
                const_spec((16, 64)),   # w3
                const_spec((16, 1)),    # b3
            ],
            out_specs=pl.BlockSpec((1, 16, tm), lambda b, t: (b, 0, t)),
        ),
        compiler_params=pltpu.CompilerParams(
            dimension_semantics=("parallel", "parallel"),
            vmem_limit_bytes=32 * 1024 * 1024),
    )(x2, w1, b1, w2.astype(compute_dtype), b2, w3.astype(compute_dtype), b3)

    # Output is already (B, 16, pixels): slice off padding and reshape (free).
    return out[:, :, :HW].reshape(B, 16, H, W)


def init_point_one_channel_params(key):
    """conv1(1->64), conv2(64->64), conv3(64->16); kaiming-normal W, zero bias."""
    k1, k2, k3 = jax.random.split(key, 3)
    # kaiming_normal: std = sqrt(2 / fan_in), fan_in = in_ch * 1 * 1
    w1 = jax.random.normal(k1, (64, 1), jnp.float32) * jnp.sqrt(2.0 / 1.0)
    w2 = jax.random.normal(k2, (64, 64), jnp.float32) * jnp.sqrt(2.0 / 64.0)
    w3 = jax.random.normal(k3, (16, 64), jnp.float32) * jnp.sqrt(2.0 / 64.0)
    b1 = jnp.zeros((64, 1), jnp.float32)
    b2 = jnp.zeros((64, 1), jnp.float32)
    b3 = jnp.zeros((16, 1), jnp.float32)
    return (w1, b1, w2, b2, w3, b3)


def _reference_forward(params, x):
    """Pure-JAX f32 reference for PointOneChannel.forward. x: (B,1,H,W)."""
    w1, b1, w2, b2, w3, b3 = params
    B, _, H, W = x.shape
    xf = x.reshape(B, 1, H * W).astype(jnp.float32)
    h1 = jnp.maximum(w1[None] * xf + b1[None], 0.0)                      # (B,64,N)
    h2 = jnp.maximum(jnp.einsum('ij,bjn->bin', w2, h1) + b2[None], 0.0)  # (B,64,N)
    y = jnp.einsum('ij,bjn->bin', w3, h2) + b3[None]                     # (B,16,N)
    return jnp.round(y).reshape(B, 16, H, W)


if __name__ == "__main__":
    key = jax.random.PRNGKey(0)
    kp, kx1, kx2 = jax.random.split(key, 3)
    params = init_point_one_channel_params(kp)

    # (B, 1, H, W) single-channel input (what conv1 expects), modest scale.
    x = jax.random.normal(kx1, (2, 1, 16, 16), jnp.float32) * 4.0
    ref = _reference_forward(params, x)

    # f32-matmul path: faithful to the PyTorch module up to MXU accumulation order.
    out_f32 = jax.block_until_ready(
        point_one_channel_forward(params, x, compute_dtype=jnp.float32))
    assert out_f32.shape == (2, 16, 16, 16)
    assert float(jnp.max(jnp.abs(out_f32 - ref))) <= 1.0

    # bf16-matmul path (default; faster on v6e/v7x MXU).  bf16 operand error is
    # << 0.5 at this scale, so post-round values differ from f32 by at most 1.
    out_bf16 = jax.block_until_ready(point_one_channel_forward(params, x))
    assert out_bf16.shape == (2, 16, 16, 16)
    assert float(jnp.max(jnp.abs(out_bf16 - ref))) <= 1.0

    # Odd spatial size: exercises lane padding and the B==1 pixel-axis split.
    x_odd = jax.random.normal(kx2, (1, 1, 24, 24), jnp.float32) * 4.0
    out_odd = jax.block_until_ready(point_one_channel_forward(params, x_odd))
    ref_odd = _reference_forward(params, x_odd)
    assert out_odd.shape == (1, 16, 24, 24)
    assert float(jnp.max(jnp.abs(out_odd - ref_odd))) <= 1.0

    print("KERNEL_OK")
</pallas_src>

<mosaic_0001>
module attributes {stable_mosaic.version = 11 : i64} {
  func.func @_point_one_channel_kernel(%arg0: i32, %arg1: i32, %arg2: memref<1x1x256xf32, #tpu.memory_space<vmem>>, %arg3: memref<64x1xf32, #tpu.memory_space<vmem>>, %arg4: memref<64x1xf32, #tpu.memory_space<vmem>>, %arg5: memref<64x64xf32, #tpu.memory_space<vmem>>, %arg6: memref<64x1xf32, #tpu.memory_space<vmem>>, %arg7: memref<16x64xf32, #tpu.memory_space<vmem>>, %arg8: memref<16x1xf32, #tpu.memory_space<vmem>>, %arg9: memref<1x16x256xf32, #tpu.memory_space<vmem>>) attributes {dimension_semantics = [#tpu.dimension_semantics<parallel>, #tpu.dimension_semantics<parallel>], iteration_bounds = array<i64: 2, 1>, scalar_prefetch = 0 : i64, scratch_operands = 0 : i64, tpu.core_type = #tpu.core_type<tc>, window_params = [{transform_indices = @transform_0, window_bounds = array<i64: 1, 1, 256>}, {pipeline_mode = #tpu.pipeline_mode<synchronous>, transform_indices = @transform_1, window_bounds = array<i64: 64, 1>}, {pipeline_mode = #tpu.pipeline_mode<synchronous>, transform_indices = @transform_2, window_bounds = array<i64: 64, 1>}, {pipeline_mode = #tpu.pipeline_mode<synchronous>, transform_indices = @transform_3, window_bounds = array<i64: 64, 64>}, {pipeline_mode = #tpu.pipeline_mode<synchronous>, transform_indices = @transform_4, window_bounds = array<i64: 64, 1>}, {pipeline_mode = #tpu.pipeline_mode<synchronous>, transform_indices = @transform_5, window_bounds = array<i64: 16, 64>}, {pipeline_mode = #tpu.pipeline_mode<synchronous>, transform_indices = @transform_6, window_bounds = array<i64: 16, 1>}, {transform_indices = @transform_7, window_bounds = array<i64: 1, 16, 256>}]} {
    %c0 = arith.constant 0 : index
    %c0_0 = arith.constant 0 : index
    %c0_1 = arith.constant 0 : index
    %0 = vector.load %arg2[%c0, %c0_0, %c0_1] : memref<1x1x256xf32, #tpu.memory_space<vmem>>, vector<1x1x256xf32>
    %1 = vector.shape_cast %0 : vector<1x1x256xf32> to vector<1x256xf32>
    %c0_2 = arith.constant 0 : index
    %c0_3 = arith.constant 0 : index
    %2 = vector.load %arg3[%c0_2, %c0_3] : memref<64x1xf32, #tpu.memory_space<vmem>>, vector<64x1xf32>
    %3 = vector.broadcast %2 : vector<64x1xf32> to vector<64x256xf32>
    %4 = vector.broadcast %1 : vector<1x256xf32> to vector<64x256xf32>
    %5 = arith.mulf %3, %4 : vector<64x256xf32>
    %c0_4 = arith.constant 0 : index
    %c0_5 = arith.constant 0 : index
    %6 = vector.load %arg4[%c0_4, %c0_5] : memref<64x1xf32, #tpu.memory_space<vmem>>, vector<64x1xf32>
    %7 = vector.broadcast %6 : vector<64x1xf32> to vector<64x256xf32>
    %8 = arith.addf %5, %7 : vector<64x256xf32>
    %cst = arith.constant 0.000000e+00 : f32
    %9 = vector.broadcast %cst : f32 to vector<64x256xf32>
    %10 = arith.maximumf %8, %9 : vector<64x256xf32>
    %c0_6 = arith.constant 0 : index
    %c0_7 = arith.constant 0 : index
    %11 = vector.load %arg5[%c0_6, %c0_7] : memref<64x64xf32, #tpu.memory_space<vmem>>, vector<64x64xf32>
    %cst_8 = arith.constant dense<0.000000e+00> : vector<64x256xf32>
    %12 = tpu.matmul %11, %10, %cst_8 {dimension_numbers = #tpu.dot_dimension_numbers<[1], [0], [0], [1], [0, 0, 1, 1], [], []>} : vector<64x64xf32>, vector<64x256xf32>, vector<64x256xf32> -> vector<64x256xf32>
    %c0_9 = arith.constant 0 : index
    %c0_10 = arith.constant 0 : index
    %13 = vector.load %arg6[%c0_9, %c0_10] : memref<64x1xf32, #tpu.memory_space<vmem>>, vector<64x1xf32>
    %14 = vector.broadcast %13 : vector<64x1xf32> to vector<64x256xf32>
    %15 = arith.addf %12, %14 : vector<64x256xf32>
    %cst_11 = arith.constant 0.000000e+00 : f32
    %16 = vector.broadcast %cst_11 : f32 to vector<64x256xf32>
    %17 = arith.maximumf %15, %16 : vector<64x256xf32>
    %c0_12 = arith.constant 0 : index
    %c0_13 = arith.constant 0 : index
    %18 = vector.load %arg7[%c0_12, %c0_13] : memref<16x64xf32, #tpu.memory_space<vmem>>, vector<16x64xf32>
    %cst_14 = arith.constant dense<0.000000e+00> : vector<16x256xf32>
    %19 = tpu.matmul %18, %17, %cst_14 {dimension_numbers = #tpu.dot_dimension_numbers<[1], [0], [0], [1], [0, 0, 1, 1], [], []>} : vector<16x64xf32>, vector<64x256xf32>, vector<16x256xf32> -> vector<16x256xf32>
    %c0_15 = arith.constant 0 : index
    %c0_16 = arith.constant 0 : index
    %20 = vector.load %arg8[%c0_15, %c0_16] : memref<16x1xf32, #tpu.memory_space<vmem>>, vector<16x1xf32>
    %21 = vector.broadcast %20 : vector<16x1xf32> to vector<16x256xf32>
    %22 = arith.addf %19, %21 : vector<16x256xf32>
    %23 = math.roundeven %22 : vector<16x256xf32>
    %c0_17 = arith.constant 0 : index
    %c0_18 = arith.constant 0 : index
    %c0_19 = arith.constant 0 : index
    %24 = vector.load %arg9[%c0_17, %c0_18, %c0_19] : memref<1x16x256xf32, #tpu.memory_space<vmem>>, vector<1x16x256xf32>
    %25 = vector.shape_cast %24 : vector<1x16x256xf32> to vector<16x256xf32>
    %26 = vector.shape_cast %23 : vector<16x256xf32> to vector<1x16x256xf32>
    tpu.vector_store %arg9[%c0_17, %c0_18, %c0_19], %26 {strides = array<i32>} : memref<1x16x256xf32, #tpu.memory_space<vmem>>, vector<1x16x256xf32>,
    return
  }
  func.func @transform_0(%arg0: i32, %arg1: i32) -> (i32, i32, i32) {
    %c0_i32 = arith.constant 0 : i32
    %c0_i32_0 = arith.constant 0 : i32
    return %arg0, %c0_i32, %arg1 : i32, i32, i32
  }
  func.func @transform_1(%arg0: i32, %arg1: i32) -> (i32, i32) {
    %c0_i32 = arith.constant 0 : i32
    %c0_i32_0 = arith.constant 0 : i32
    %c0_i32_1 = arith.constant 0 : i32
    return %c0_i32, %c0_i32_0 : i32, i32
  }
  func.func @transform_2(%arg0: i32, %arg1: i32) -> (i32, i32) {
    %c0_i32 = arith.constant 0 : i32
    %c0_i32_0 = arith.constant 0 : i32
    %c0_i32_1 = arith.constant 0 : i32
    return %c0_i32, %c0_i32_0 : i32, i32
  }
  func.func @transform_3(%arg0: i32, %arg1: i32) -> (i32, i32) {
    %c0_i32 = arith.constant 0 : i32
    %c0_i32_0 = arith.constant 0 : i32
    %c0_i32_1 = arith.constant 0 : i32
    return %c0_i32, %c0_i32_0 : i32, i32
  }
  func.func @transform_4(%arg0: i32, %arg1: i32) -> (i32, i32) {
    %c0_i32 = arith.constant 0 : i32
    %c0_i32_0 = arith.constant 0 : i32
    %c0_i32_1 = arith.constant 0 : i32
    return %c0_i32, %c0_i32_0 : i32, i32
  }
  func.func @transform_5(%arg0: i32, %arg1: i32) -> (i32, i32) {
    %c0_i32 = arith.constant 0 : i32
    %c0_i32_0 = arith.constant 0 : i32
    %c0_i32_1 = arith.constant 0 : i32
    return %c0_i32, %c0_i32_0 : i32, i32
  }
  func.func @transform_6(%arg0: i32, %arg1: i32) -> (i32, i32) {
    %c0_i32 = arith.constant 0 : i32
    %c0_i32_0 = arith.constant 0 : i32
    %c0_i32_1 = arith.constant 0 : i32
    return %c0_i32, %c0_i32_0 : i32, i32
  }
  func.func @transform_7(%arg0: i32, %arg1: i32) -> (i32, i32, i32) {
    %c0_i32 = arith.constant 0 : i32
    %c0_i32_0 = arith.constant 0 : i32
    return %arg0, %c0_i32, %arg1 : i32, i32, i32
  }
}

</mosaic_0001>

<llo_original>
// kernel: tpu_custom_call.1
$region0: #{tpu_custom_call.1}
  #allocation0 [shape = 'u32[]', space=smem, size = 0x4, offset = 0x4, fixed_abs, tag = 'smem constant byte address 0x4 - core index']
  #allocation1 [shape = 'u32[72,128]{1,0:T(1,128)}', space=vmem, size = 0x9000, scoped, tag = 'internal scratch']
  %s0 = inlined_call_operand.vmem [shape: f32[2,1,256], index: 0, kind: input, shape index: {}]
  %s1 = inlined_call_operand.vmem [shape: f32[64,1], index: 1, kind: input, shape index: {}]
  %s2 = inlined_call_operand.vmem [shape: f32[64,1], index: 2, kind: input, shape index: {}]
  %s3 = inlined_call_operand.vmem [shape: f32[64,64], index: 3, kind: input, shape index: {}]
  %s4 = inlined_call_operand.vmem [shape: f32[64,1], index: 4, kind: input, shape index: {}]
  %s5 = inlined_call_operand.vmem [shape: f32[16,64], index: 5, kind: input, shape index: {}]
  %s6 = inlined_call_operand.vmem [shape: f32[16,1], index: 6, kind: input, shape index: {}]
  %s7 = inlined_call_operand.hbm [shape: f32[2,16,256], index: 7, kind: output, shape index: {}]
  %s8 = sld [smem:[#allocation0]]
  $region61: #{tpu_custom_call.1} parent=0
    _
  %s10 = ssub.s32 1, %s8
  %s11 = scalar_select 0, %s10, %s8
  $region1: #{tpu_custom_call.1} parent=0
    #allocation2 [shape = 'u8[32768]{0}', space=vmem, size = 0x8000, scoped, tag = 'output window, operand 0']
    #allocation3 [shape = 's32[2]{0}', space=sflag, size = 0x8, scoped, tag = 'scoped memory for tpu_custom_call.1']
    %12 = vsyncpa [#allocation3], 0
    %s13 = scalar_lea.sflag [#allocation3], 1
    %14 = vsyncpa %s13, 0
    loop: start=0, step=1, limit=4
    $region2: #{tpu_custom_call.1} parent=1 // loop_pre_header
      _
    $region3: #{tpu_custom_call.1} parent=1 // loop_header
      %s16 = sphi 0, %s20
      %p17 = scmp.ge.s32.totalorder %s16, 4
      %s23 = sphi 0, %s35
      %s24 = sphi 0, %s31
      %s25 = sphi 0, %s23
      %s26 = sphi 0, %s24
      %s27 = sphi 0, %s25
      %s28 = sphi 0, %s26
      %s40 = sphi 0, %s42
      %s43 = sphi 0, %s40
      %s44 = sphi 0, %s43
      %s60 = sphi 0, %s44
      %s64 = sphi 0, %s64
      %s66 = sphi 0, %s64
      %s67 = sphi 0, %s66
      %s81 = sphi 0, %s67
      %s85 = sphi 0, %s85
      %s87 = sphi 0, %s85
      %s88 = sphi 0, %s87
      %s102 = sphi 0, %s88
      %s106 = sphi 0, %s106
      %s108 = sphi 0, %s106
      %s109 = sphi 0, %s108
      %s123 = sphi 0, %s109
      %s127 = sphi 0, %s127
      %s129 = sphi 0, %s127
      %s130 = sphi 0, %s129
      %s144 = sphi 0, %s130
      %s148 = sphi 0, %s148
      %s150 = sphi 0, %s148
      %s151 = sphi 0, %s150
      %s165 = sphi 0, %s151
      %s169 = sphi 0, %s169
      %s171 = sphi 0, %s169
      %s172 = sphi 0, %s171
      %s186 = sphi 0, %s172
      %s194 = sphi 0, %s196
      %s197 = sphi 0, %s194
      %s198 = sphi 0, %s197
      %s214 = sphi 0, %s198
    $region4: #{tpu_custom_call.1} parent=1 // loop_header_branch
      %19 = sbr.rel (%p17) target = $region8
    $region5: #{tpu_custom_call.1} parent=1 // loop_body
      %s21 = ssub.s32 %s16, 1
      %s22 = ssub.s32 %s16, 2
      %s29 = sadd.s32 1, %s24
      %p30 = scmp.ge.s32.totalorder %s29, 1
      %s31 = scalar_select %p30, 0, %s29
      %s32 = sadd.s32 1, %s23
      %s33 = scalar_select %p30, %s32, %s23
      %p34 = scmp.ge.s32.totalorder %s33, 2
      %s35 = scalar_select %p34, 0, %s33
      %s36 = ssub.s32 %s23, %s35
      %s37 = ssub.s32 %s24, %s31
      %s38 = sor.u32 %s36, %s37
      %p39 = scmp.eq.s32.totalorder %s38, 0
      %s41 = sadd.s32 %s40, 1
      %s42 = scalar_select %p39, %s40, %s41
      %p45 = pneg %p39
      %p46 = scmp.eq.s32.totalorder %s16, 1
      %p47 = por %p45, %p46
      %p48 = scmp.ne.s32.totalorder %s40, %s43
      %p49 = scmp.eq.s32.totalorder %s16, 0
      %p50 = por %p48, %p49
      %p51 = scmp.ne.s32.totalorder %s40, %s43
      %p52 = scmp.eq.s32.totalorder %s21, 1
      %p53 = por %p51, %p52
      %p54 = scmp.ne.s32.totalorder %s43, %s44
      %p55 = scmp.eq.s32.totalorder %s21, 0
      %p56 = por %p54, %p55
      %p57 = scmp.ne.s32.totalorder %s43, %s44
      %p58 = scmp.eq.s32.totalorder %s22, 1
      %p59 = por %p57, %p58
      %p61 = scmp.ne.s32.totalorder %s44, %s60
      %p62 = scmp.eq.s32.totalorder %s22, 0
      %p63 = por %p61, %p62
      %s65 = sadd.s32 %s64, 1
      %p68 = scmp.eq.s32.totalorder %s16, 1
      %p69 = scmp.ne.s32.totalorder %s64, %s66
      %p70 = scmp.eq.s32.totalorder %s16, 0
      %p71 = por %p69, %p70
      %p72 = scmp.ne.s32.totalorder %s64, %s66
      %p73 = scmp.eq.s32.totalorder %s21, 1
      %p74 = por %p72, %p73
      %p75 = scmp.ne.s32.totalorder %s66, %s67
      %p76 = scmp.eq.s32.totalorder %s21, 0
      %p77 = por %p75, %p76
      %p78 = scmp.ne.s32.totalorder %s66, %s67
      %p79 = scmp.eq.s32.totalorder %s22, 1
      %p80 = por %p78, %p79
      %p82 = scmp.ne.s32.totalorder %s67, %s81
      %p83 = scmp.eq.s32.totalorder %s22, 0
      %p84 = por %p82, %p83
      %s86 = sadd.s32 %s85, 1
      %p89 = scmp.eq.s32.totalorder %s16, 1
      %p90 = scmp.ne.s32.totalorder %s85, %s87
      %p91 = scmp.eq.s32.totalorder %s16, 0
      %p92 = por %p90, %p91
      %p93 = scmp.ne.s32.totalorder %s85, %s87
      %p94 = scmp.eq.s32.totalorder %s21, 1
      %p95 = por %p93, %p94
      %p96 = scmp.ne.s32.totalorder %s87, %s88
      %p97 = scmp.eq.s32.totalorder %s21, 0
      %p98 = por %p96, %p97
      %p99 = scmp.ne.s32.totalorder %s87, %s88
      %p100 = scmp.eq.s32.totalorder %s22, 1
      %p101 = por %p99, %p100
      %p103 = scmp.ne.s32.totalorder %s88, %s102
      %p104 = scmp.eq.s32.totalorder %s22, 0
      %p105 = por %p103, %p104
      %s107 = sadd.s32 %s106, 1
      %p110 = scmp.eq.s32.totalorder %s16, 1
      %p111 = scmp.ne.s32.totalorder %s106, %s108
      %p112 = scmp.eq.s32.totalorder %s16, 0
      %p113 = por %p111, %p112
      %p114 = scmp.ne.s32.totalorder %s106, %s108
      %p115 = scmp.eq.s32.totalorder %s21, 1
      %p116 = por %p114, %p115
      %p117 = scmp.ne.s32.totalorder %s108, %s109
      %p118 = scmp.eq.s32.totalorder %s21, 0
      %p119 = por %p117, %p118
      %p120 = scmp.ne.s32.totalorder %s108, %s109
      %p121 = scmp.eq.s32.totalorder %s22, 1
      %p122 = por %p120, %p121
      %p124 = scmp.ne.s32.totalorder %s109, %s123
      %p125 = scmp.eq.s32.totalorder %s22, 0
      %p126 = por %p124, %p125
      %s128 = sadd.s32 %s127, 1
      %p131 = scmp.eq.s32.totalorder %s16, 1
      %p132 = scmp.ne.s32.totalorder %s127, %s129
      %p133 = scmp.eq.s32.totalorder %s16, 0
      %p134 = por %p132, %p133
      %p135 = scmp.ne.s32.totalorder %s127, %s129
      %p136 = scmp.eq.s32.totalorder %s21, 1
      %p137 = por %p135, %p136
      %p138 = scmp.ne.s32.totalorder %s129, %s130
      %p139 = scmp.eq.s32.totalorder %s21, 0
      %p140 = por %p138, %p139
      %p141 = scmp.ne.s32.totalorder %s129, %s130
      %p142 = scmp.eq.s32.totalorder %s22, 1
      %p143 = por %p141, %p142
      %p145 = scmp.ne.s32.totalorder %s130, %s144
      %p146 = scmp.eq.s32.totalorder %s22, 0
      %p147 = por %p145, %p146
      %s149 = sadd.s32 %s148, 1
      %p152 = scmp.eq.s32.totalorder %s16, 1
      %p153 = scmp.ne.s32.totalorder %s148, %s150
      %p154 = scmp.eq.s32.totalorder %s16, 0
      %p155 = por %p153, %p154
      %p156 = scmp.ne.s32.totalorder %s148, %s150
      %p157 = scmp.eq.s32.totalorder %s21, 1
      %p158 = por %p156, %p157
      %p159 = scmp.ne.s32.totalorder %s150, %s151
      %p160 = scmp.eq.s32.totalorder %s21, 0
      %p161 = por %p159, %p160
      %p162 = scmp.ne.s32.totalorder %s150, %s151
      %p163 = scmp.eq.s32.totalorder %s22, 1
      %p164 = por %p162, %p163
      %p166 = scmp.ne.s32.totalorder %s151, %s165
      %p167 = scmp.eq.s32.totalorder %s22, 0
      %p168 = por %p166, %p167
      %s170 = sadd.s32 %s169, 1
      %p173 = scmp.eq.s32.totalorder %s16, 1
      %p174 = scmp.ne.s32.totalorder %s169, %s171
      %p175 = scmp.eq.s32.totalorder %s16, 0
      %p176 = por %p174, %p175
      %p177 = scmp.ne.s32.totalorder %s169, %s171
      %p178 = scmp.eq.s32.totalorder %s21, 1
      %p179 = por %p177, %p178
      %p180 = scmp.ne.s32.totalorder %s171, %s172
      %p181 = scmp.eq.s32.totalorder %s21, 0
      %p182 = por %p180, %p181
      %p183 = scmp.ne.s32.totalorder %s171, %s172
      %p184 = scmp.eq.s32.totalorder %s22, 1
      %p185 = por %p183, %p184
      %p187 = scmp.ne.s32.totalorder %s172, %s186
      %p188 = scmp.eq.s32.totalorder %s22, 0
      %p189 = por %p187, %p188
      %s190 = ssub.s32 %s23, %s35
      %s191 = ssub.s32 %s24, %s31
      %s192 = sor.u32 %s190, %s191
      %p193 = scmp.eq.s32.totalorder %s192, 0
      %s195 = sadd.s32 %s194, 1
      %s196 = scalar_select %p193, %s194, %s195
      %p199 = pneg %p193
      %p200 = scmp.eq.s32.totalorder %s16, 1
      %p201 = por %p199, %p200
      %p202 = scmp.ne.s32.totalorder %s194, %s197
      %p203 = scmp.eq.s32.totalorder %s16, 0
      %p204 = por %p202, %p203
      %p205 = scmp.ne.s32.totalorder %s194, %s197
      %p206 = scmp.eq.s32.totalorder %s21, 1
      %p207 = por %p205, %p206
      %p208 = scmp.ne.s32.totalorder %s197, %s198
      %p209 = scmp.eq.s32.totalorder %s21, 0
      %p210 = por %p208, %p209
      %p211 = scmp.ne.s32.totalorder %s197, %s198
      %p212 = scmp.eq.s32.totalorder %s22, 1
      %p213 = por %p211, %p212
      %p215 = scmp.ne.s32.totalorder %s198, %s214
      %p216 = scmp.eq.s32.totalorder %s22, 0
      %p217 = por %p215, %p216
      %p218 = scmp.le.s32.totalorder 1, %s16
      %p219 = scmp.lt.s32.totalorder %s16, 3
      %p220 = pnand %p218, %p219
      %p221 = pneg %p220
      // Predicated region
      $region9: #{tpu_custom_call.1} parent=5 // pred_check
        _
      $region10: #{tpu_custom_call.1} parent=5 // pred_check_branch
        %223 = sbr.rel (%p220) target = $region12
      $region11: #{tpu_custom_call.1} parent=5 // pred_region
        %s224 = ssub.s32 %s16, 1
        // Predicated region
        $region13: #{tpu_custom_call.1} parent=11 // pred_check
          %p225 = pneg %p77
        $region14: #{tpu_custom_call.1} parent=11 // pred_check_branch
          %227 = sbr.rel (%p225) target = $region16
        $region15: #{tpu_custom_call.1} parent=11 // pred_region
          _
        $region16: #{tpu_custom_call.1} parent=11 // pred_fallthru
          _
        // Predicated region
        $region17: #{tpu_custom_call.1} parent=11 // pred_check
          %p228 = pneg %p98
        $region18: #{tpu_custom_call.1} parent=11 // pred_check_branch
          %230 = sbr.rel (%p228) target = $region20
        $region19: #{tpu_custom_call.1} parent=11 // pred_region
          _
        $region20: #{tpu_custom_call.1} parent=11 // pred_fallthru
          _
        // Predicated region
        $region21: #{tpu_custom_call.1} parent=11 // pred_check
          %p231 = pneg %p119
        $region22: #{tpu_custom_call.1} parent=11 // pred_check_branch
          %233 = sbr.rel (%p231) target = $region24
        $region23: #{tpu_custom_call.1} parent=11 // pred_region
          _
        $region24: #{tpu_custom_call.1} parent=11 // pred_fallthru
          _
        // Predicated region
        $region25: #{tpu_custom_call.1} parent=11 // pred_check
          %p234 = pneg %p140
        $region26: #{tpu_custom_call.1} parent=11 // pred_check_branch
          %236 = sbr.rel (%p234) target = $region28
        $region27: #{tpu_custom_call.1} parent=11 // pred_region
          _
        $region28: #{tpu_custom_call.1} parent=11 // pred_fallthru
          _
        // Predicated region
        $region29: #{tpu_custom_call.1} parent=11 // pred_check
          %p237 = pneg %p161
        $region30: #{tpu_custom_call.1} parent=11 // pred_check_branch
          %239 = sbr.rel (%p237) target = $region32
        $region31: #{tpu_custom_call.1} parent=11 // pred_region
          _
        $region32: #{tpu_custom_call.1} parent=11 // pred_fallthru
          _
        // Predicated region
        $region33: #{tpu_custom_call.1} parent=11 // pred_check
          %p240 = pneg %p182
        $region34: #{tpu_custom_call.1} parent=11 // pred_check_branch
          %242 = sbr.rel (%p240) target = $region36
        $region35: #{tpu_custom_call.1} parent=11 // pred_region
          _
        $region36: #{tpu_custom_call.1} parent=11 // pred_fallthru
          _
      $region12: #{tpu_custom_call.1} parent=5 // pred_fallthru
        _
      %p243 = scmp.lt.s32.totalorder %s16, 2
      // Predicated region
      $region37: #{tpu_custom_call.1} parent=5 // pred_check
        %p244 = pneg %p243
      $region38: #{tpu_custom_call.1} parent=5 // pred_check_branch
        %246 = sbr.rel (%p244) target = $region40
      $region39: #{tpu_custom_call.1} parent=5 // pred_region
        // Predicated region
        $region41: #{tpu_custom_call.1} parent=39 // pred_check
          %p247 = pneg %p50
        $region42: #{tpu_custom_call.1} parent=39 // pred_check_branch
          %249 = sbr.rel (%p247) target = $region44
        $region43: #{tpu_custom_call.1} parent=39 // pred_region
          %s250 = smul.u32 2, %s24
          %p251 = scmp.lt.s32.totalorder %s23, 1
          %s252 = scalar_select %p251, %s23, 1
          %p253 = scmp.lt.s32.totalorder %s250, 1
          %s254 = scalar_select %p253, %s250, 1
          %s255 = smul.addr %s252, 2
          %s256 = sadd.s32 %s254, %s255
          %s257 = scalar_lea.vmem %s0, %s256
          %s258 = smul.u32 2, %s24
        $region44: #{tpu_custom_call.1} parent=39 // pred_fallthru
          _
      $region40: #{tpu_custom_call.1} parent=5 // pred_fallthru
        _
      %p259 = scmp.le.s32.totalorder 1, %s16
      %p260 = scmp.lt.s32.totalorder %s16, 3
      %p261 = pnand %p259, %p260
      %p262 = pneg %p261
      // Predicated region
      $region45: #{tpu_custom_call.1} parent=5 // pred_check
        _
      $region46: #{tpu_custom_call.1} parent=5 // pred_check_branch
        %264 = sbr.rel (%p261) target = $region48
      $region47: #{tpu_custom_call.1} parent=5 // pred_region
        %s265 = ssub.s32 %s16, 1
        %s266 = smul.u32 2, %s26
        %p267 = scmp.lt.s32.totalorder %s25, 1
        %s268 = scalar_select %p267, %s25, 1
        %p269 = scmp.lt.s32.totalorder %s266, 1
        %s270 = scalar_select %p269, %s266, 1
        %s271 = smul.addr %s268, 2
        %s272 = sadd.s32 %s270, %s271
        %s273 = scalar_lea.vmem %s0, %s272
        %p274 = pneg %p56
        %p275 = pneg %p53
        %p276 = pneg %p77
        %p277 = pneg %p74
        %p278 = pneg %p98
        %p279 = pneg %p95
        %p280 = pneg %p119
        %p281 = pneg %p116
        %p282 = pneg %p140
        %p283 = pneg %p137
        %p284 = pneg %p161
        %p285 = pneg %p158
        %p286 = pneg %p182
        %p287 = pneg %p179
        %p288 = pneg %p210
        %p289 = pneg %p207
        %s290 = sand.u32 %s197, 1
        %s291 = scalar_lea.sflag [#allocation3], %s290
        %s292 = sand.u32 %s197, 1
        %s293 = smul.addr %s292, 32
        %s294 = scalar_lea.vmem [#allocation2], %s293
        %s295 = smul.u32 2, %s26
        %p296 = scmp.lt.s32.totalorder %s25, 1
        %s297 = scalar_select %p296, %s25, 1
        %p298 = scmp.lt.s32.totalorder %s295, 1
        %s299 = scalar_select %p298, %s295, 1
        %s300 = smul.addr %s297, 2
        %s301 = sadd.s32 %s299, %s300
        %s302 = scalar_lea.vmem %s0, %s301
        %s303 = smul.u32 2, %s26
        %s304 = smul.u32 2, %s26
        %v305 = vld [vmem:[%s302] sm:$0x3]
        %v306 = vld [vmem:[%s1] sm:$0xff]
        %v307 = vld [vmem:[%s1 + $0x8] sm:$0xff]
        %v308 = vld [vmem:[%s1 + $0x10] sm:$0xff]
        %v309 = vld [vmem:[%s1 + $0x18] sm:$0xff]
        %v310 = vld [vmem:[%s1 + $0x20] sm:$0xff]
        %v311 = vld [vmem:[%s1 + $0x28] sm:$0xff]
        %v312 = vld [vmem:[%s1 + $0x30] sm:$0xff]
        %v313 = vld [vmem:[%s1 + $0x38] sm:$0xff]
        %315 = vset.pattern.permute.xlu0 0
        %316 = vperm.xlu0 %315, %v306
        %v317 = vpop.permute.xlu0 %316
        %320 = vset.pattern.permute.xlu0 0
        %321 = vperm.xlu0 %320, %v307
        %v322 = vpop.permute.xlu0 %321
        %325 = vset.pattern.permute.xlu0 0
        %326 = vperm.xlu0 %325, %v308
        %v327 = vpop.permute.xlu0 %326
        %330 = vset.pattern.permute.xlu0 0
        %331 = vperm.xlu0 %330, %v309
        %v332 = vpop.permute.xlu0 %331
        %335 = vset.pattern.permute.xlu0 0
        %336 = vperm.xlu0 %335, %v310
        %v337 = vpop.permute.xlu0 %336
        %340 = vset.pattern.permute.xlu0 0
        %341 = vperm.xlu0 %340, %v311
        %v342 = vpop.permute.xlu0 %341
        %345 = vset.pattern.permute.xlu0 0
        %346 = vperm.xlu0 %345, %v312
        %v347 = vpop.permute.xlu0 %346
        %350 = vset.pattern.permute.xlu0 0
        %351 = vperm.xlu0 %350, %v313
        %v352 = vpop.permute.xlu0 %351
        %v355 = vperm.slane %v305, 0
        %v356 = vperm.slane %v305, 1
        %v359 = vmul.f32 %v317, %v355
        %v360 = vmul.f32 %v317, %v356
        %v361 = vmul.f32 %v322, %v355
        %v362 = vmul.f32 %v322, %v356
        %v363 = vmul.f32 %v327, %v355
        %v364 = vmul.f32 %v327, %v356
        %v365 = vmul.f32 %v332, %v355
        %v366 = vmul.f32 %v332, %v356
        %v367 = vmul.f32 %v337, %v355
        %v368 = vmul.f32 %v337, %v356
        %v369 = vmul.f32 %v342, %v355
        %v370 = vmul.f32 %v342, %v356
        %v371 = vmul.f32 %v347, %v355
        %v372 = vmul.f32 %v347, %v356
        %v373 = vmul.f32 %v352, %v355
        %v374 = vmul.f32 %v352, %v356
        %v375 = vld [vmem:[%s2] sm:$0xff]
        %v376 = vld [vmem:[%s2 + $0x8] sm:$0xff]
        %v377 = vld [vmem:[%s2 + $0x10] sm:$0xff]
        %v378 = vld [vmem:[%s2 + $0x18] sm:$0xff]
        %v379 = vld [vmem:[%s2 + $0x20] sm:$0xff]
        %v380 = vld [vmem:[%s2 + $0x28] sm:$0xff]
        %v381 = vld [vmem:[%s2 + $0x30] sm:$0xff]
        %v382 = vld [vmem:[%s2 + $0x38] sm:$0xff]
        %384 = vset.pattern.permute.xlu0 0
        %385 = vperm.xlu0 %384, %v375
        %v386 = vpop.permute.xlu0 %385
        %389 = vset.pattern.permute.xlu0 0
        %390 = vperm.xlu0 %389, %v376
        %v391 = vpop.permute.xlu0 %390
        %394 = vset.pattern.permute.xlu0 0
        %395 = vperm.xlu0 %394, %v377
        %v396 = vpop.permute.xlu0 %395
        %399 = vset.pattern.permute.xlu0 0
        %400 = vperm.xlu0 %399, %v378
        %v401 = vpop.permute.xlu0 %400
        %404 = vset.pattern.permute.xlu0 0
        %405 = vperm.xlu0 %404, %v379
        %v406 = vpop.permute.xlu0 %405
        %409 = vset.pattern.permute.xlu0 0
        %410 = vperm.xlu0 %409, %v380
        %v411 = vpop.permute.xlu0 %410
        %414 = vset.pattern.permute.xlu0 0
        %415 = vperm.xlu0 %414, %v381
        %v416 = vpop.permute.xlu0 %415
        %419 = vset.pattern.permute.xlu0 0
        %420 = vperm.xlu0 %419, %v382
        %v421 = vpop.permute.xlu0 %420
        %v423 = vadd.f32 %v359, %v386
        %v424 = vadd.f32 %v360, %v386
        %v425 = vadd.f32 %v361, %v391
        %v426 = vadd.f32 %v362, %v391
        %v427 = vadd.f32 %v363, %v396
        %v428 = vadd.f32 %v364, %v396
        %v429 = vadd.f32 %v365, %v401
        %v430 = vadd.f32 %v366, %v401
        %v431 = vadd.f32 %v367, %v406
        %v432 = vadd.f32 %v368, %v406
        %v433 = vadd.f32 %v369, %v411
        %v434 = vadd.f32 %v370, %v411
        %v435 = vadd.f32 %v371, %v416
        %v436 = vadd.f32 %v372, %v416
        %v437 = vadd.f32 %v373, %v421
        %v438 = vadd.f32 %v374, %v421
        %v439 = vmax.f32 %v423, 0.0
        %v440 = vmax.f32 %v424, 0.0
        %v441 = vmax.f32 %v425, 0.0
        %v442 = vmax.f32 %v426, 0.0
        %v443 = vmax.f32 %v427, 0.0
        %v444 = vmax.f32 %v428, 0.0
        %v445 = vmax.f32 %v429, 0.0
        %v446 = vmax.f32 %v430, 0.0
        %v447 = vmax.f32 %v431, 0.0
        %v448 = vmax.f32 %v432, 0.0
        %v449 = vmax.f32 %v433, 0.0
        %v450 = vmax.f32 %v434, 0.0
        %v451 = vmax.f32 %v435, 0.0
        %v452 = vmax.f32 %v436, 0.0
        %v453 = vmax.f32 %v437, 0.0
        %v454 = vmax.f32 %v438, 0.0
        %v455 = vld [vmem:[%s3] sm:$0xff]
        %v456 = vld [vmem:[%s3 + $0x8] sm:$0xff]
        %v457 = vld [vmem:[%s3 + $0x10] sm:$0xff]
        %v458 = vld [vmem:[%s3 + $0x18] sm:$0xff]
        %v459 = vld [vmem:[%s3 + $0x20] sm:$0xff]
        %v460 = vld [vmem:[%s3 + $0x28] sm:$0xff]
        %v461 = vld [vmem:[%s3 + $0x30] sm:$0xff]
        %v462 = vld [vmem:[%s3 + $0x38] sm:$0xff]
        %v463 = vld [vmem:[%s4] sm:$0xff]
        %v464 = vld [vmem:[%s4 + $0x8] sm:$0xff]
        %v465 = vld [vmem:[%s4 + $0x10] sm:$0xff]
        %v466 = vld [vmem:[%s4 + $0x18] sm:$0xff]
        %v467 = vld [vmem:[%s4 + $0x20] sm:$0xff]
        %v468 = vld [vmem:[%s4 + $0x28] sm:$0xff]
        %v469 = vld [vmem:[%s4 + $0x30] sm:$0xff]
        %v470 = vld [vmem:[%s4 + $0x38] sm:$0xff]
        %472 = vset.pattern.permute.xlu0 0
        %473 = vperm.xlu0 %472, %v463
        %v474 = vpop.permute.xlu0 %473
        %477 = vset.pattern.permute.xlu0 0
        %478 = vperm.xlu0 %477, %v464
        %v479 = vpop.permute.xlu0 %478
        %482 = vset.pattern.permute.xlu0 0
        %483 = vperm.xlu0 %482, %v465
        %v484 = vpop.permute.xlu0 %483
        %487 = vset.pattern.permute.xlu0 0
        %488 = vperm.xlu0 %487, %v466
        %v489 = vpop.permute.xlu0 %488
        %492 = vset.pattern.permute.xlu0 0
        %493 = vperm.xlu0 %492, %v467
        %v494 = vpop.permute.xlu0 %493
        %497 = vset.pattern.permute.xlu0 0
        %498 = vperm.xlu0 %497, %v468
        %v499 = vpop.permute.xlu0 %498
        %502 = vset.pattern.permute.xlu0 0
        %503 = vperm.xlu0 %502, %v469
        %v504 = vpop.permute.xlu0 %503
        %507 = vset.pattern.permute.xlu0 0
        %508 = vperm.xlu0 %507, %v470
        %v509 = vpop.permute.xlu0 %508
        %vm511 = vcmask 523264
        %v513 = vsel %vm511, %v455, 0
        %v516 = vsel %vm511, %v456, 0
        %v519 = vsel %vm511, %v457, 0
        %v522 = vsel %vm511, %v458, 0
        %v525 = vsel %vm511, %v459, 0
        %v528 = vsel %vm511, %v460, 0
        %v531 = vsel %vm511, %v461, 0
        %v534 = vsel %vm511, %v462, 0
        %536 = vmatpush.msra.mxu0 0.0
        %537 = vmatpush.msra.mxu0 0.0
        %538 = vmatpush.msra.mxu0 0.0
        %539 = vmatpush.msra.mxu0 0.0
        %540 = vmatpush.msra.mxu0 0.0
        %541 = vmatpush.msra.mxu0 0.0
        %542 = vmatpush.msra.mxu0 0.0
        %543 = vmatpush.msra.mxu0 0.0
        %544 = vmatpush.msra.mxu0 %v453
        %545 = vmatpush.msra.mxu0 %v451
        %546 = vmatpush.msra.mxu0 %v449
        %547 = vmatpush.msra.mxu0 %v447
        %548 = vmatpush.msra.mxu0 %v445
        %549 = vmatpush.msra.mxu0 %v443
        %550 = vmatpush.msra.mxu0 %v441
        %551 = vmatpush.msra.mxu0 %v439
        %552 = vmatmul.f32.gmra.mxu0 %v513
        %v553 = vpop.f32.mrf.mxu0
        %v554 = vadd.f32 %v474, %v553
        %555 = vmatmul.f32.gmra.mxu0 %v516
        %v556 = vpop.f32.mrf.mxu0
        %v557 = vadd.f32 %v479, %v556
        %558 = vmatmul.f32.gmra.mxu0 %v519
        %v559 = vpop.f32.mrf.mxu0
        %v560 = vadd.f32 %v484, %v559
        %561 = vmatmul.f32.gmra.mxu0 %v522
        %v562 = vpop.f32.mrf.mxu0
        %v563 = vadd.f32 %v489, %v562
        %564 = vmatmul.f32.gmra.mxu0 %v525
        %v565 = vpop.f32.mrf.mxu0
        %v566 = vadd.f32 %v494, %v565
        %567 = vmatmul.f32.gmra.mxu0 %v528
        %v568 = vpop.f32.mrf.mxu0
        %v569 = vadd.f32 %v499, %v568
        %570 = vmatmul.f32.gmra.mxu0 %v531
        %v571 = vpop.f32.mrf.mxu0
        %v572 = vadd.f32 %v504, %v571
        %573 = vmatmul.f32.gmra.mxu0 %v534
        %v574 = vpop.f32.mrf.mxu0
        %v575 = vadd.f32 %v509, %v574
        %576 = vdwg.mxu0
        %577 = vmatpush.msra.mxu0 0.0
        %578 = vmatpush.msra.mxu0 0.0
        %579 = vmatpush.msra.mxu0 0.0
        %580 = vmatpush.msra.mxu0 0.0
        %581 = vmatpush.msra.mxu0 0.0
        %582 = vmatpush.msra.mxu0 0.0
        %583 = vmatpush.msra.mxu0 0.0
        %584 = vmatpush.msra.mxu0 0.0
        %585 = vmatpush.msra.mxu0 %v454
        %586 = vmatpush.msra.mxu0 %v452
        %587 = vmatpush.msra.mxu0 %v450
        %588 = vmatpush.msra.mxu0 %v448
        %589 = vmatpush.msra.mxu0 %v446
        %590 = vmatpush.msra.mxu0 %v444
        %591 = vmatpush.msra.mxu0 %v442
        %592 = vmatpush.msra.mxu0 %v440
        %593 = vmatmul.f32.gmra.mxu0 %v513
        %v594 = vpop.f32.mrf.mxu0
        %v595 = vadd.f32 %v474, %v594
        %596 = vmatmul.f32.gmra.mxu0 %v516
        %v597 = vpop.f32.mrf.mxu0
        %v598 = vadd.f32 %v479, %v597
        %599 = vmatmul.f32.gmra.mxu0 %v519
        %v600 = vpop.f32.mrf.mxu0
        %v601 = vadd.f32 %v484, %v600
        %602 = vmatmul.f32.gmra.mxu0 %v522
        %v603 = vpop.f32.mrf.mxu0
        %v604 = vadd.f32 %v489, %v603
        %605 = vmatmul.f32.gmra.mxu0 %v525
        %v606 = vpop.f32.mrf.mxu0
        %v607 = vadd.f32 %v494, %v606
        %608 = vmatmul.f32.gmra.mxu0 %v528
        %v609 = vpop.f32.mrf.mxu0
        %v610 = vadd.f32 %v499, %v609
        %611 = vmatmul.f32.gmra.mxu0 %v531
        %v612 = vpop.f32.mrf.mxu0
        %v613 = vadd.f32 %v504, %v612
        %614 = vmatmul.f32.gmra.mxu0 %v534
        %v615 = vpop.f32.mrf.mxu0
        %v616 = vadd.f32 %v509, %v615
        %617 = vdwg.mxu0
        %v618 = vmax.f32 %v554, 0.0
        %v619 = vmax.f32 %v595, 0.0
        %v620 = vmax.f32 %v557, 0.0
        %v621 = vmax.f32 %v598, 0.0
        %v622 = vmax.f32 %v560, 0.0
        %v623 = vmax.f32 %v601, 0.0
        %v624 = vmax.f32 %v563, 0.0
        %v625 = vmax.f32 %v604, 0.0
        %v626 = vmax.f32 %v566, 0.0
        %v627 = vmax.f32 %v607, 0.0
        %v628 = vmax.f32 %v569, 0.0
        %v629 = vmax.f32 %v610, 0.0
        %v630 = vmax.f32 %v572, 0.0
        %v631 = vmax.f32 %v613, 0.0
        %v632 = vmax.f32 %v575, 0.0
        %v633 = vmax.f32 %v616, 0.0
        %v634 = vld [vmem:[%s5] sm:$0xff]
        %v635 = vld [vmem:[%s5 + $0x8] sm:$0xff]
        %v636 = vld [vmem:[%s6] sm:$0xff]
        %v637 = vld [vmem:[%s6 + $0x8] sm:$0xff]
        %639 = vset.pattern.permute.xlu0 0
        %640 = vperm.xlu0 %639, %v636
        %v641 = vpop.permute.xlu0 %640
        %644 = vset.pattern.permute.xlu0 0
        %645 = vperm.xlu0 %644, %v637
        %v646 = vpop.permute.xlu0 %645
        %v649 = vsel %vm511, %v634, 0
        %v652 = vsel %vm511, %v635, 0
        %654 = vmatpush.msra.mxu0 0.0
        %655 = vmatpush.msra.mxu0 0.0
        %656 = vmatpush.msra.mxu0 0.0
        %657 = vmatpush.msra.mxu0 0.0
        %658 = vmatpush.msra.mxu0 0.0
        %659 = vmatpush.msra.mxu0 0.0
        %660 = vmatpush.msra.mxu0 0.0
        %661 = vmatpush.msra.mxu0 0.0
        %662 = vmatpush.msra.mxu0 %v632
        %663 = vmatpush.msra.mxu0 %v630
        %664 = vmatpush.msra.mxu0 %v628
        %665 = vmatpush.msra.mxu0 %v626
        %666 = vmatpush.msra.mxu0 %v624
        %667 = vmatpush.msra.mxu0 %v622
        %668 = vmatpush.msra.mxu0 %v620
        %669 = vmatpush.msra.mxu0 %v618
        %670 = vmatmul.f32.gmra.mxu0 %v649
        %v671 = vpop.f32.mrf.mxu0
        %v672 = vadd.f32 %v641, %v671
        %673 = vmatmul.f32.gmra.mxu0 %v652
        %v674 = vpop.f32.mrf.mxu0
        %v675 = vadd.f32 %v646, %v674
        %676 = vdwg.mxu0
        %677 = vmatpush.msra.mxu0 0.0
        %678 = vmatpush.msra.mxu0 0.0
        %679 = vmatpush.msra.mxu0 0.0
        %680 = vmatpush.msra.mxu0 0.0
        %681 = vmatpush.msra.mxu0 0.0
        %682 = vmatpush.msra.mxu0 0.0
        %683 = vmatpush.msra.mxu0 0.0
        %684 = vmatpush.msra.mxu0 0.0
        %685 = vmatpush.msra.mxu0 %v633
        %686 = vmatpush.msra.mxu0 %v631
        %687 = vmatpush.msra.mxu0 %v629
        %688 = vmatpush.msra.mxu0 %v627
        %689 = vmatpush.msra.mxu0 %v625
        %690 = vmatpush.msra.mxu0 %v623
        %691 = vmatpush.msra.mxu0 %v621
        %692 = vmatpush.msra.mxu0 %v619
        %693 = vmatmul.f32.gmra.mxu0 %v649
        %v694 = vpop.f32.mrf.mxu0
        %v695 = vadd.f32 %v641, %v694
        %696 = vmatmul.f32.gmra.mxu0 %v652
        %v697 = vpop.f32.mrf.mxu0
        %v698 = vadd.f32 %v646, %v697
        %699 = vdwg.mxu0
        %v700 = vround.ne.pseudo %v672
        %v701 = vround.ne.pseudo %v695
        %v702 = vround.ne.pseudo %v675
        %v703 = vround.ne.pseudo %v698
        %704 = vst [vmem:[%s294] sm:$0xff] %v700
        %705 = vst [vmem:[%s294 + $0x8] sm:$0xff] %v701
        %706 = vst [vmem:[%s294 + $0x10] sm:$0xff] %v702
        %707 = vst [vmem:[%s294 + $0x18] sm:$0xff] %v703
        %s708 = sand.u32 %s197, 1
        %s709 = scalar_lea.sflag [#allocation3], %s708
        %s710 = sand.u32 %s197, 1
        %s711 = smul.addr %s710, 32
        %s712 = scalar_lea.vmem [#allocation2], %s711
        // Predicated region
        $region49: #{tpu_custom_call.1} parent=47 // pred_check
          %p713 = pneg %p207
        $region50: #{tpu_custom_call.1} parent=47 // pred_check_branch
          %715 = sbr.rel (%p713) target = $region52
        $region51: #{tpu_custom_call.1} parent=47 // pred_region
          %s716 = smul.u32 2, %s26
          %718 = vsyncadd %s709, 0
          %s719 = smul.addr %s25, 4
          %s720 = sadd.s32 %s716, %s719
          %s721 = smul.addr %s720, 8
          %s722 = scalar_lea.hbm %s7, %s721
          %s723 = sshll.u32 %s712, 4
          %s724 = int_to_ptr.vmem [resolvable:$true] %s723
          %s725 = sshll.u32 %s722, 4
          %s726 = int_to_ptr.hbm [resolvable:$true] %s725
          %731 = dma.vmem_to_hbm [thread:$0]  %s724, 512, %s726, %s709, 256, 256, 16
        $region52: #{tpu_custom_call.1} parent=47 // pred_fallthru
          _
      $region48: #{tpu_custom_call.1} parent=5 // pred_fallthru
        _
      %p732 = scmp.le.s32.totalorder 2, %s16
      // Predicated region
      $region53: #{tpu_custom_call.1} parent=5 // pred_check
        %p733 = pneg %p732
      $region54: #{tpu_custom_call.1} parent=5 // pred_check_branch
        %735 = sbr.rel (%p733) target = $region56
      $region55: #{tpu_custom_call.1} parent=5 // pred_region
        %s736 = ssub.s32 %s16, 2
        // Predicated region
        $region57: #{tpu_custom_call.1} parent=55 // pred_check
          %p737 = pneg %p213
        $region58: #{tpu_custom_call.1} parent=55 // pred_check_branch
          %739 = sbr.rel (%p737) target = $region60
        $region59: #{tpu_custom_call.1} parent=55 // pred_region
          %s740 = sand.u32 %s198, 1
          %s741 = scalar_lea.sflag [#allocation3], %s740
          %s742 = sand.u32 %s198, 1
          %s743 = smul.addr %s742, 32
          %s744 = scalar_lea.vmem [#allocation2], %s743
          %746 = dma.done %s741, 512
        $region60: #{tpu_custom_call.1} parent=55 // pred_fallthru
          _
      $region56: #{tpu_custom_call.1} parent=5 // pred_fallthru
        _
    $region6: #{tpu_custom_call.1} parent=1 // loop_footer
      %s20 = sadd.s32 1, %s16
    $region7: #{tpu_custom_call.1} parent=1 // loop_footer_branch
      %15 = sbr.rel target = $region3
    $region8: #{tpu_custom_call.1} parent=1 // loop_exit
      _
    %747 = vsyncpa [#allocation3], 1
    %s748 = scalar_lea.sflag [#allocation3], 1
    %749 = vsyncpa %s748, 1

</llo_original>
